<compile_context>
chip_gen: v5e
topology: v5e:2x2
jax: 0.10.0
libtpu: 0.0.40
codegen_flags: <defaults>
</compile_context>

<pallas_src>
import functools

import jax
import jax.numpy as jnp
from jax import lax
from jax.experimental import pallas as pl
from jax.experimental.pallas import tpu as pltpu


def _round_up(n, m):
    return -(-n // m) * m


def _largest_divisor_leq(n, cap):
    for d in range(min(n, cap), 0, -1):
        if n % d == 0:
            return d
    return 1


def rnn_chunk_kernel(x_ref, wih_ref, whh_ref, bh_ref, who_ref, bo_ref,
                     out_ref, hfin_ref, hx_ref, hcarry_ref, *, Tc, Bc):
    ti = pl.program_id(1)

    # Fresh hidden state at the start of each sequence (per batch chunk).
    @pl.when(ti == 0)
    def _():
        hcarry_ref[...] = jnp.zeros_like(hcarry_ref)

    # ---- Hoisted, non-recurrent input projection for the whole time chunk.
    # (Tc*Bc, I) @ (I, Hp) + b_h -> VMEM scratch (not vregs), so the
    # recurrence below never pins a (Tc*Bc, Hp) live value.
    hx_ref[...] = (jnp.dot(x_ref[...], wih_ref[...],
                           preferred_element_type=jnp.float32)
                   + bh_ref[...])

    # ---- Serial recurrence: only h @ W_hh^T stays on the critical path.
    def step(t, h):
        row = pl.multiple_of(t * Bc, Bc)            # sublane-aligned (Bc % 8 == 0)
        pre = hx_ref[pl.ds(row, Bc), :] + jnp.dot(
            h, whh_ref[...], preferred_element_type=jnp.float32)
        h = jnp.tanh(pre)                           # EUP slot; off the VALU path
        hx_ref[pl.ds(row, Bc), :] = h               # overwrite pre-act with h_t
        return h

    h_last = lax.fori_loop(0, Tc, step, hcarry_ref[...], unroll=True)
    hcarry_ref[...] = h_last                        # carry h across time chunks

    # ---- Batched output projection for the chunk + one lane-dense store.
    out_ref[...] = (jnp.dot(hx_ref[...], who_ref[...],
                            preferred_element_type=jnp.float32)
                    + bo_ref[...]).astype(out_ref.dtype)

    # Final hidden state written exactly once, at the last time chunk.
    @pl.when(ti == pl.num_programs(1) - 1)
    def _():
        hfin_ref[...] = h_last.astype(hfin_ref.dtype)


def simple_rnn_forward(x, w_ih, w_hh, b_h, w_ho, b_o, *, time_chunk=None):
    """x: (B, T, I). Weights follow torch.nn.Linear convention (out, in)."""
    B, T, I = x.shape
    H = w_ih.shape[0]
    O = w_ho.shape[0]

    LANE = 128
    # Batch: pad to a multiple of 8 sublanes; chunk at 128 rows for big batches.
    B8 = _round_up(B, 8)
    B_chunk = B8 if B8 <= 128 else 128
    B_pad = _round_up(B, B_chunk)
    n_bc = B_pad // B_chunk

    # Lane-dense hidden / output widths (zero padding is exact: padded h lanes
    # stay 0 because the padded weight columns/rows and bias entries are 0).
    H_pad = _round_up(H, LANE)
    O_pad = _round_up(O, LANE)

    # Time chunking: Tc must divide T (no fake timesteps — they would corrupt
    # the final hidden state).
    if time_chunk is None:
        time_chunk = _largest_divisor_leq(T, 8)
    assert T % time_chunk == 0, "time_chunk must divide sequence length"
    Tc = time_chunk
    n_tc = T // Tc
    rows_per_chunk = Tc * B_chunk

    # ---- Layouts: rows flattened as ((bi*T + t) * B_chunk + b). -----------
    x_pad = jnp.pad(x, ((0, B_pad - B), (0, 0), (0, 0)))               # (B_pad, T, I)
    x_r = x_pad.reshape(n_bc, B_chunk, T, I).transpose(0, 2, 1, 3)      # (n_bc, T, Bc, I)
    x2 = x_r.reshape(n_bc * T * B_chunk, I)

    # Pre-transpose + zero-pad weights so the kernel does plain row-major GEMMs.
    wih_t = jnp.pad(w_ih.T, ((0, 0), (0, H_pad - H)))                   # (I, Hp)
    whh_t = jnp.pad(w_hh.T, ((0, H_pad - H), (0, H_pad - H)))           # (Hp, Hp)
    bh_2d = jnp.pad(b_h.reshape(1, H), ((0, 0), (0, H_pad - H)))        # (1, Hp)
    who_t = jnp.pad(w_ho.T, ((0, H_pad - H), (0, O_pad - O)))           # (Hp, Op)
    bo_2d = jnp.pad(b_o.reshape(1, O), ((0, 0), (0, O_pad - O)))        # (1, Op)

    # ---- VMEM budget (double-buffered pipeline blocks + resident scratch),
    # clamped so the same plan fits v7x's 64 MiB VMEM.
    fbytes = 4
    est = (2 * rows_per_chunk * max(I, LANE) * fbytes        # x chunk (lane-rounded)
           + 2 * rows_per_chunk * O_pad * fbytes             # output chunk
           + 2 * B_chunk * H_pad * fbytes                    # final-hidden block
           + 2 * (I * H_pad + H_pad * H_pad + H_pad
                  + H_pad * O_pad + O_pad) * fbytes          # resident weights/biases
           + (rows_per_chunk + B_chunk) * H_pad * fbytes)    # VMEM scratch
    vmem_limit = int(min(max(2 * est, 32 * 1024 * 1024), 48 * 1024 * 1024))

    kernel = functools.partial(rnn_chunk_kernel, Tc=Tc, Bc=B_chunk)

    out2, h_fin = pl.pallas_call(
        kernel,
        out_shape=(
            jax.ShapeDtypeStruct((n_bc * T * B_chunk, O_pad), x.dtype),
            jax.ShapeDtypeStruct((B_pad, H_pad), x.dtype),
        ),
        grid_spec=pltpu.PrefetchScalarGridSpec(
            num_scalar_prefetch=0,
            grid=(n_bc, n_tc),
            in_specs=[
                pl.BlockSpec((rows_per_chunk, I),
                             lambda bi, ti: (bi * n_tc + ti, 0)),        # x chunk
                pl.BlockSpec((I, H_pad), lambda bi, ti: (0, 0)),         # W_ih^T (resident)
                pl.BlockSpec((H_pad, H_pad), lambda bi, ti: (0, 0)),     # W_hh^T (resident)
                pl.BlockSpec((1, H_pad), lambda bi, ti: (0, 0)),         # b_h
                pl.BlockSpec((H_pad, O_pad), lambda bi, ti: (0, 0)),     # W_ho^T (resident)
                pl.BlockSpec((1, O_pad), lambda bi, ti: (0, 0)),         # b_o
            ],
            out_specs=(
                pl.BlockSpec((rows_per_chunk, O_pad),
                             lambda bi, ti: (bi * n_tc + ti, 0)),        # y chunk
                pl.BlockSpec((B_chunk, H_pad), lambda bi, ti: (bi, 0)),  # final h
            ),
            scratch_shapes=[
                pltpu.VMEM((rows_per_chunk, H_pad), jnp.float32),  # pre-act / h_t slab
                pltpu.VMEM((B_chunk, H_pad), jnp.float32),         # h carried over time
            ],
        ),
        compiler_params=pltpu.CompilerParams(
            dimension_semantics=("parallel", "arbitrary"),
            vmem_limit_bytes=vmem_limit,
        ),
    )(x2, wih_t, whh_t, bh_2d, who_t, bo_2d)

    # Strip padding and restore the PyTorch (B, T, O) / (B, H) convention.
    out_r = out2.reshape(n_bc, T, B_chunk, O_pad).transpose(0, 2, 1, 3)
    outputs = out_r.reshape(B_pad, T, O_pad)[:B, :, :O]
    h_final = h_fin[:B, :H]
    return outputs, h_final


def reference_rnn(x, w_ih, w_hh, b_h, w_ho, b_o):
    B, T, I = x.shape
    H = w_ih.shape[0]
    h = jnp.zeros((B, H), dtype=jnp.float32)
    outs = []
    for t in range(T):
        x_t = x[:, t, :]
        h = jnp.tanh(x_t @ w_ih.T + h @ w_hh.T + b_h)
        outs.append(h @ w_ho.T + b_o)
    return jnp.stack(outs, axis=1), h


if __name__ == "__main__":
    B, T, I, H, O = 2, 8, 4, 32, 6

    key = jax.random.PRNGKey(0)
    k_x, k_ih, k_hh, k_ho, k_bo = jax.random.split(key, 5)

    x = jax.random.normal(k_x, (B, T, I), dtype=jnp.float32)

    # Deterministic parameter init (shapes follow the torch module's __init__).
    w_ih = jax.random.normal(k_ih, (H, I), dtype=jnp.float32) * 0.2
    w_hh = jax.random.normal(k_hh, (H, H), dtype=jnp.float32) * 0.2
    b_h = jnp.zeros((H,), dtype=jnp.float32)
    w_ho = jax.random.normal(k_ho, (O, H), dtype=jnp.float32) * 0.2
    b_o = jax.random.normal(k_bo, (O,), dtype=jnp.float32) * 0.1

    fwd = jax.jit(simple_rnn_forward, static_argnames=("time_chunk",))
    # time_chunk=4 -> two time chunks, exercising the cross-chunk h carry.
    outputs, h_final = fwd(x, w_ih, w_hh, b_h, w_ho, b_o, time_chunk=4)
    jax.block_until_ready((outputs, h_final))

    ref_out, ref_h = reference_rnn(x, w_ih, w_hh, b_h, w_ho, b_o)
    assert outputs.shape == (B, T, O) and h_final.shape == (B, H)
    assert jnp.allclose(outputs, ref_out, atol=1e-5, rtol=1e-5)
    assert jnp.allclose(h_final, ref_h, atol=1e-5, rtol=1e-5)

    print("KERNEL_OK")
</pallas_src>

<mosaic_0001>
module attributes {stable_mosaic.version = 11 : i64} {
  func.func @rnn_chunk_kernel(%arg0: i32, %arg1: i32, %arg2: memref<32x4xf32, #tpu.memory_space<vmem>>, %arg3: memref<4x128xf32, #tpu.memory_space<vmem>>, %arg4: memref<128x128xf32, #tpu.memory_space<vmem>>, %arg5: memref<1x128xf32, #tpu.memory_space<vmem>>, %arg6: memref<128x128xf32, #tpu.memory_space<vmem>>, %arg7: memref<1x128xf32, #tpu.memory_space<vmem>>, %arg8: memref<32x128xf32, #tpu.memory_space<vmem>>, %arg9: memref<8x128xf32, #tpu.memory_space<vmem>>, %arg10: memref<32x128xf32, #tpu.memory_space<vmem>>, %arg11: memref<8x128xf32, #tpu.memory_space<vmem>>) attributes {dimension_semantics = [#tpu.dimension_semantics<parallel>, #tpu.dimension_semantics<arbitrary>], iteration_bounds = array<i64: 1, 2>, scalar_prefetch = 0 : i64, scratch_operands = 2 : i64, tpu.core_type = #tpu.core_type<tc>, window_params = [{transform_indices = @transform_0, window_bounds = array<i64: 32, 4>}, {pipeline_mode = #tpu.pipeline_mode<synchronous>, transform_indices = @transform_1, window_bounds = array<i64: 4, 128>}, {pipeline_mode = #tpu.pipeline_mode<synchronous>, transform_indices = @transform_2, window_bounds = array<i64: 128, 128>}, {pipeline_mode = #tpu.pipeline_mode<synchronous>, transform_indices = @transform_3, window_bounds = array<i64: 1, 128>}, {pipeline_mode = #tpu.pipeline_mode<synchronous>, transform_indices = @transform_4, window_bounds = array<i64: 128, 128>}, {pipeline_mode = #tpu.pipeline_mode<synchronous>, transform_indices = @transform_5, window_bounds = array<i64: 1, 128>}, {transform_indices = @transform_6, window_bounds = array<i64: 32, 128>}, {transform_indices = @transform_7, window_bounds = array<i64: 8, 128>}]} {
    %c0_i32 = arith.constant 0 : i32
    %0 = arith.cmpi eq, %arg1, %c0_i32 : i32
    %1 = arith.extui %0 : i1 to i32
    %c0_i32_0 = arith.constant 0 : i32
    %2 = arith.cmpi ne, %1, %c0_i32_0 : i32
    scf.if %2 {
      %cst_47 = arith.constant 0.000000e+00 : f32
      %62 = vector.broadcast %cst_47 : f32 to vector<8x128xf32>
      %c0_48 = arith.constant 0 : index
      %c0_49 = arith.constant 0 : index
      %63 = vector.load %arg11[%c0_48, %c0_49] : memref<8x128xf32, #tpu.memory_space<vmem>>, vector<8x128xf32>
      tpu.vector_store %arg11[%c0_48, %c0_49], %62 {strides = array<i32>} : memref<8x128xf32, #tpu.memory_space<vmem>>, vector<8x128xf32>,
    } else {
    }
    %c0 = arith.constant 0 : index
    %c0_1 = arith.constant 0 : index
    %3 = vector.load %arg2[%c0, %c0_1] : memref<32x4xf32, #tpu.memory_space<vmem>>, vector<32x4xf32>
    %c0_2 = arith.constant 0 : index
    %c0_3 = arith.constant 0 : index
    %4 = vector.load %arg3[%c0_2, %c0_3] : memref<4x128xf32, #tpu.memory_space<vmem>>, vector<4x128xf32>
    %cst = arith.constant dense<0.000000e+00> : vector<32x128xf32>
    %5 = tpu.matmul %3, %4, %cst {dimension_numbers = #tpu.dot_dimension_numbers<[1], [0], [0], [1], [0, 0, 1, 1], [], []>} : vector<32x4xf32>, vector<4x128xf32>, vector<32x128xf32> -> vector<32x128xf32>
    %c0_4 = arith.constant 0 : index
    %c0_5 = arith.constant 0 : index
    %6 = vector.load %arg5[%c0_4, %c0_5] : memref<1x128xf32, #tpu.memory_space<vmem>>, vector<1x128xf32>
    %7 = vector.broadcast %6 : vector<1x128xf32> to vector<32x128xf32>
    %8 = arith.addf %5, %7 : vector<32x128xf32>
    %c0_6 = arith.constant 0 : index
    %c0_7 = arith.constant 0 : index
    %9 = vector.load %arg10[%c0_6, %c0_7] : memref<32x128xf32, #tpu.memory_space<vmem>>, vector<32x128xf32>
    tpu.vector_store %arg10[%c0_6, %c0_7], %8 {strides = array<i32>} : memref<32x128xf32, #tpu.memory_space<vmem>>, vector<32x128xf32>,
    %c0_8 = arith.constant 0 : index
    %c0_9 = arith.constant 0 : index
    %10 = vector.load %arg11[%c0_8, %c0_9] : memref<8x128xf32, #tpu.memory_space<vmem>>, vector<8x128xf32>
    %c0_i32_10 = arith.constant 0 : i32
    %c8_i32 = arith.constant 8 : i32
    %11 = arith.muli %c0_i32_10, %c8_i32 : i32
    %12 = tpu.assume_multiple %11, 8 : i32
    %13 = arith.index_cast %12 : i32 to index
    %c0_11 = arith.constant 0 : index
    %14 = vector.load %arg10[%13, %c0_11] : memref<32x128xf32, #tpu.memory_space<vmem>>, vector<8x128xf32>
    %c0_12 = arith.constant 0 : index
    %c0_13 = arith.constant 0 : index
    %15 = vector.load %arg4[%c0_12, %c0_13] : memref<128x128xf32, #tpu.memory_space<vmem>>, vector<128x128xf32>
    %cst_14 = arith.constant dense<0.000000e+00> : vector<8x128xf32>
    %16 = tpu.matmul %10, %15, %cst_14 {dimension_numbers = #tpu.dot_dimension_numbers<[1], [0], [0], [1], [0, 0, 1, 1], [], []>} : vector<8x128xf32>, vector<128x128xf32>, vector<8x128xf32> -> vector<8x128xf32>
    %17 = arith.addf %14, %16 : vector<8x128xf32>
    %18 = math.tanh %17 : vector<8x128xf32>
    %19 = arith.index_cast %12 : i32 to index
    %c0_15 = arith.constant 0 : index
    %20 = vector.load %arg10[%19, %c0_15] : memref<32x128xf32, #tpu.memory_space<vmem>>, vector<8x128xf32>
    tpu.vector_store %arg10[%19, %c0_15], %18 {strides = array<i32>} : memref<32x128xf32, #tpu.memory_space<vmem>>, vector<8x128xf32>,
    %c1_i32 = arith.constant 1 : i32
    %c8_i32_16 = arith.constant 8 : i32
    %21 = arith.muli %c1_i32, %c8_i32_16 : i32
    %22 = tpu.assume_multiple %21, 8 : i32
    %23 = arith.index_cast %22 : i32 to index
    %c0_17 = arith.constant 0 : index
    %24 = vector.load %arg10[%23, %c0_17] : memref<32x128xf32, #tpu.memory_space<vmem>>, vector<8x128xf32>
    %c0_18 = arith.constant 0 : index
    %c0_19 = arith.constant 0 : index
    %25 = vector.load %arg4[%c0_18, %c0_19] : memref<128x128xf32, #tpu.memory_space<vmem>>, vector<128x128xf32>
    %cst_20 = arith.constant dense<0.000000e+00> : vector<8x128xf32>
    %26 = tpu.matmul %18, %25, %cst_20 {dimension_numbers = #tpu.dot_dimension_numbers<[1], [0], [0], [1], [0, 0, 1, 1], [], []>} : vector<8x128xf32>, vector<128x128xf32>, vector<8x128xf32> -> vector<8x128xf32>
    %27 = arith.addf %24, %26 : vector<8x128xf32>
    %28 = math.tanh %27 : vector<8x128xf32>
    %29 = arith.index_cast %22 : i32 to index
    %c0_21 = arith.constant 0 : index
    %30 = vector.load %arg10[%29, %c0_21] : memref<32x128xf32, #tpu.memory_space<vmem>>, vector<8x128xf32>
    tpu.vector_store %arg10[%29, %c0_21], %28 {strides = array<i32>} : memref<32x128xf32, #tpu.memory_space<vmem>>, vector<8x128xf32>,
    %c2_i32 = arith.constant 2 : i32
    %c8_i32_22 = arith.constant 8 : i32
    %31 = arith.muli %c2_i32, %c8_i32_22 : i32
    %32 = tpu.assume_multiple %31, 8 : i32
    %33 = arith.index_cast %32 : i32 to index
    %c0_23 = arith.constant 0 : index
    %34 = vector.load %arg10[%33, %c0_23] : memref<32x128xf32, #tpu.memory_space<vmem>>, vector<8x128xf32>
    %c0_24 = arith.constant 0 : index
    %c0_25 = arith.constant 0 : index
    %35 = vector.load %arg4[%c0_24, %c0_25] : memref<128x128xf32, #tpu.memory_space<vmem>>, vector<128x128xf32>
    %cst_26 = arith.constant dense<0.000000e+00> : vector<8x128xf32>
    %36 = tpu.matmul %28, %35, %cst_26 {dimension_numbers = #tpu.dot_dimension_numbers<[1], [0], [0], [1], [0, 0, 1, 1], [], []>} : vector<8x128xf32>, vector<128x128xf32>, vector<8x128xf32> -> vector<8x128xf32>
    %37 = arith.addf %34, %36 : vector<8x128xf32>
    %38 = math.tanh %37 : vector<8x128xf32>
    %39 = arith.index_cast %32 : i32 to index
    %c0_27 = arith.constant 0 : index
    %40 = vector.load %arg10[%39, %c0_27] : memref<32x128xf32, #tpu.memory_space<vmem>>, vector<8x128xf32>
    tpu.vector_store %arg10[%39, %c0_27], %38 {strides = array<i32>} : memref<32x128xf32, #tpu.memory_space<vmem>>, vector<8x128xf32>,
    %c3_i32 = arith.constant 3 : i32
    %c8_i32_28 = arith.constant 8 : i32
    %41 = arith.muli %c3_i32, %c8_i32_28 : i32
    %42 = tpu.assume_multiple %41, 8 : i32
    %43 = arith.index_cast %42 : i32 to index
    %c0_29 = arith.constant 0 : index
    %44 = vector.load %arg10[%43, %c0_29] : memref<32x128xf32, #tpu.memory_space<vmem>>, vector<8x128xf32>
    %c0_30 = arith.constant 0 : index
    %c0_31 = arith.constant 0 : index
    %45 = vector.load %arg4[%c0_30, %c0_31] : memref<128x128xf32, #tpu.memory_space<vmem>>, vector<128x128xf32>
    %cst_32 = arith.constant dense<0.000000e+00> : vector<8x128xf32>
    %46 = tpu.matmul %38, %45, %cst_32 {dimension_numbers = #tpu.dot_dimension_numbers<[1], [0], [0], [1], [0, 0, 1, 1], [], []>} : vector<8x128xf32>, vector<128x128xf32>, vector<8x128xf32> -> vector<8x128xf32>
    %47 = arith.addf %44, %46 : vector<8x128xf32>
    %48 = math.tanh %47 : vector<8x128xf32>
    %49 = arith.index_cast %42 : i32 to index
    %c0_33 = arith.constant 0 : index
    %50 = vector.load %arg10[%49, %c0_33] : memref<32x128xf32, #tpu.memory_space<vmem>>, vector<8x128xf32>
    tpu.vector_store %arg10[%49, %c0_33], %48 {strides = array<i32>} : memref<32x128xf32, #tpu.memory_space<vmem>>, vector<8x128xf32>,
    %c4_i32 = arith.constant 4 : i32
    %c0_34 = arith.constant 0 : index
    %c0_35 = arith.constant 0 : index
    %51 = vector.load %arg11[%c0_34, %c0_35] : memref<8x128xf32, #tpu.memory_space<vmem>>, vector<8x128xf32>
    tpu.vector_store %arg11[%c0_34, %c0_35], %48 {strides = array<i32>} : memref<8x128xf32, #tpu.memory_space<vmem>>, vector<8x128xf32>,
    %c0_36 = arith.constant 0 : index
    %c0_37 = arith.constant 0 : index
    %52 = vector.load %arg10[%c0_36, %c0_37] : memref<32x128xf32, #tpu.memory_space<vmem>>, vector<32x128xf32>
    %c0_38 = arith.constant 0 : index
    %c0_39 = arith.constant 0 : index
    %53 = vector.load %arg6[%c0_38, %c0_39] : memref<128x128xf32, #tpu.memory_space<vmem>>, vector<128x128xf32>
    %cst_40 = arith.constant dense<0.000000e+00> : vector<32x128xf32>
    %54 = tpu.matmul %52, %53, %cst_40 {dimension_numbers = #tpu.dot_dimension_numbers<[1], [0], [0], [1], [0, 0, 1, 1], [], []>} : vector<32x128xf32>, vector<128x128xf32>, vector<32x128xf32> -> vector<32x128xf32>
    %c0_41 = arith.constant 0 : index
    %c0_42 = arith.constant 0 : index
    %55 = vector.load %arg7[%c0_41, %c0_42] : memref<1x128xf32, #tpu.memory_space<vmem>>, vector<1x128xf32>
    %56 = vector.broadcast %55 : vector<1x128xf32> to vector<32x128xf32>
    %57 = arith.addf %54, %56 : vector<32x128xf32>
    %c0_43 = arith.constant 0 : index
    %c0_44 = arith.constant 0 : index
    %58 = vector.load %arg8[%c0_43, %c0_44] : memref<32x128xf32, #tpu.memory_space<vmem>>, vector<32x128xf32>
    tpu.vector_store %arg8[%c0_43, %c0_44], %57 {strides = array<i32>} : memref<32x128xf32, #tpu.memory_space<vmem>>, vector<32x128xf32>,
    %c1_i32_45 = arith.constant 1 : i32
    %59 = arith.cmpi eq, %arg1, %c1_i32_45 : i32
    %60 = arith.extui %59 : i1 to i32
    %c0_i32_46 = arith.constant 0 : i32
    %61 = arith.cmpi ne, %60, %c0_i32_46 : i32
    scf.if %61 {
      %c0_47 = arith.constant 0 : index
      %c0_48 = arith.constant 0 : index
      %62 = vector.load %arg9[%c0_47, %c0_48] : memref<8x128xf32, #tpu.memory_space<vmem>>, vector<8x128xf32>
      tpu.vector_store %arg9[%c0_47, %c0_48], %48 {strides = array<i32>} : memref<8x128xf32, #tpu.memory_space<vmem>>, vector<8x128xf32>,
    } else {
    }
    return
  }
  func.func @transform_0(%arg0: i32, %arg1: i32) -> (i32, i32) {
    %c2_i32 = arith.constant 2 : i32
    %0 = arith.muli %arg0, %c2_i32 : i32
    %1 = arith.addi %0, %arg1 : i32
    %c0_i32 = arith.constant 0 : i32
    %c0_i32_0 = arith.constant 0 : i32
    return %1, %c0_i32 : i32, i32
  }
  func.func @transform_1(%arg0: i32, %arg1: i32) -> (i32, i32) {
    %c0_i32 = arith.constant 0 : i32
    %c0_i32_0 = arith.constant 0 : i32
    %c0_i32_1 = arith.constant 0 : i32
    return %c0_i32, %c0_i32_0 : i32, i32
  }
  func.func @transform_2(%arg0: i32, %arg1: i32) -> (i32, i32) {
    %c0_i32 = arith.constant 0 : i32
    %c0_i32_0 = arith.constant 0 : i32
    %c0_i32_1 = arith.constant 0 : i32
    return %c0_i32, %c0_i32_0 : i32, i32
  }
  func.func @transform_3(%arg0: i32, %arg1: i32) -> (i32, i32) {
    %c0_i32 = arith.constant 0 : i32
    %c0_i32_0 = arith.constant 0 : i32
    %c0_i32_1 = arith.constant 0 : i32
    return %c0_i32, %c0_i32_0 : i32, i32
  }
  func.func @transform_4(%arg0: i32, %arg1: i32) -> (i32, i32) {
    %c0_i32 = arith.constant 0 : i32
    %c0_i32_0 = arith.constant 0 : i32
    %c0_i32_1 = arith.constant 0 : i32
    return %c0_i32, %c0_i32_0 : i32, i32
  }
  func.func @transform_5(%arg0: i32, %arg1: i32) -> (i32, i32) {
    %c0_i32 = arith.constant 0 : i32
    %c0_i32_0 = arith.constant 0 : i32
    %c0_i32_1 = arith.constant 0 : i32
    return %c0_i32, %c0_i32_0 : i32, i32
  }
  func.func @transform_6(%arg0: i32, %arg1: i32) -> (i32, i32) {
    %c2_i32 = arith.constant 2 : i32
    %0 = arith.muli %arg0, %c2_i32 : i32
    %1 = arith.addi %0, %arg1 : i32
    %c0_i32 = arith.constant 0 : i32
    %c0_i32_0 = arith.constant 0 : i32
    return %1, %c0_i32 : i32, i32
  }
  func.func @transform_7(%arg0: i32, %arg1: i32) -> (i32, i32) {
    %c0_i32 = arith.constant 0 : i32
    %c0_i32_0 = arith.constant 0 : i32
    return %arg0, %c0_i32 : i32, i32
  }
}

</mosaic_0001>

<llo_original>
// kernel: simple_rnn_forward.1
$region0: #{simple_rnn_forward.1}
  #allocation0 [shape = 'u32[]', space=smem, size = 0x4, offset = 0x4, fixed_abs, tag = 'smem constant byte address 0x4 - core index']
  #allocation1 [shape = 'u32[72,128]{1,0:T(1,128)}', space=vmem, size = 0x9000, scoped, tag = 'internal scratch']
  #allocation2 [shape = 'f32[32,128]{1,0:T(8,128)}', space=vmem, size = 0x4000, scoped, tag = 'scratch operand']
  #allocation3 [shape = 'f32[8,128]{1,0:T(8,128)}', space=vmem, size = 0x1000, scoped, tag = 'scratch operand']
  %s0 = inlined_call_operand.vmem [shape: f32[64,4], index: 0, kind: input, shape index: {}]
  %s1 = inlined_call_operand.vmem [shape: f32[4,128], index: 1, kind: input, shape index: {}]
  %s2 = inlined_call_operand.vmem [shape: f32[128,128], index: 2, kind: input, shape index: {}]
  %s3 = inlined_call_operand.vmem [shape: f32[1,128], index: 3, kind: input, shape index: {}]
  %s4 = inlined_call_operand.vmem [shape: f32[128,128], index: 4, kind: input, shape index: {}]
  %s5 = inlined_call_operand.vmem [shape: f32[1,128], index: 5, kind: input, shape index: {}]
  %s6 = inlined_call_operand.vmem [shape: f32[64,128], index: 6, kind: output, shape index: {0}]
  %s7 = inlined_call_operand.vmem [shape: f32[8,128], index: 7, kind: output, shape index: {1}]
  %8 = xla_tuple %s6, %s7
  %s9 = sld [smem:[#allocation0]]
  $region73: #{simple_rnn_forward.1} parent=0
    _
  %s11 = ssub.s32 1, %s9
  %s12 = scalar_select 0, %s11, %s9
  loop: start=0, step=1, limit=4
  $region2: #{simple_rnn_forward.1} parent=0 // loop_pre_header
    _
  $region3: #{simple_rnn_forward.1} parent=0 // loop_header
    %s14 = sphi 0, %s18
    %p15 = scmp.ge.s32.totalorder %s14, 4
    %s21 = sphi 0, %s33
    %s22 = sphi 0, %s29
    %s23 = sphi 0, %s21
    %s24 = sphi 0, %s22
    %s25 = sphi 0, %s23
    %s26 = sphi 0, %s24
    %s40 = sphi 0, %s42
    %s43 = sphi 0, %s40
    %s44 = sphi 0, %s43
    %s60 = sphi 0, %s44
    %s64 = sphi 0, %s64
    %s66 = sphi 0, %s64
    %s67 = sphi 0, %s66
    %s81 = sphi 0, %s67
    %s85 = sphi 0, %s85
    %s87 = sphi 0, %s85
    %s88 = sphi 0, %s87
    %s102 = sphi 0, %s88
    %s106 = sphi 0, %s106
    %s108 = sphi 0, %s106
    %s109 = sphi 0, %s108
    %s123 = sphi 0, %s109
    %s127 = sphi 0, %s127
    %s129 = sphi 0, %s127
    %s130 = sphi 0, %s129
    %s144 = sphi 0, %s130
    %s148 = sphi 0, %s148
    %s150 = sphi 0, %s148
    %s151 = sphi 0, %s150
    %s165 = sphi 0, %s151
    %s175 = sphi 0, %s177
    %s178 = sphi 0, %s175
    %s179 = sphi 0, %s178
    %s195 = sphi 0, %s179
    %s201 = sphi 0, %s203
    %s204 = sphi 0, %s201
    %s205 = sphi 0, %s204
    %s221 = sphi 0, %s205
  $region4: #{simple_rnn_forward.1} parent=0 // loop_header_branch
    %17 = sbr.rel (%p15) target = $region8
  $region5: #{simple_rnn_forward.1} parent=0 // loop_body
    %s19 = ssub.s32 %s14, 1
    %s20 = ssub.s32 %s14, 2
    %s27 = sadd.s32 1, %s22
    %p28 = scmp.ge.s32.totalorder %s27, 2
    %s29 = scalar_select %p28, 0, %s27
    %s30 = sadd.s32 1, %s21
    %s31 = scalar_select %p28, %s30, %s21
    %p32 = scmp.ge.s32.totalorder %s31, 1
    %s33 = scalar_select %p32, 0, %s31
    %s34 = smul.u32 %s21, 2
    %s35 = sadd.s32 %s34, %s22
    %s36 = smul.u32 %s33, 2
    %s37 = sadd.s32 %s36, %s29
    %s38 = ssub.s32 %s35, %s37
    %p39 = scmp.eq.s32.totalorder %s38, 0
    %s41 = sadd.s32 %s40, 1
    %s42 = scalar_select %p39, %s40, %s41
    %p45 = pneg %p39
    %p46 = scmp.eq.s32.totalorder %s14, 1
    %p47 = por %p45, %p46
    %p48 = scmp.ne.s32.totalorder %s40, %s43
    %p49 = scmp.eq.s32.totalorder %s14, 0
    %p50 = por %p48, %p49
    %p51 = scmp.ne.s32.totalorder %s40, %s43
    %p52 = scmp.eq.s32.totalorder %s19, 1
    %p53 = por %p51, %p52
    %p54 = scmp.ne.s32.totalorder %s43, %s44
    %p55 = scmp.eq.s32.totalorder %s19, 0
    %p56 = por %p54, %p55
    %p57 = scmp.ne.s32.totalorder %s43, %s44
    %p58 = scmp.eq.s32.totalorder %s20, 1
    %p59 = por %p57, %p58
    %p61 = scmp.ne.s32.totalorder %s44, %s60
    %p62 = scmp.eq.s32.totalorder %s20, 0
    %p63 = por %p61, %p62
    %s65 = sadd.s32 %s64, 1
    %p68 = scmp.eq.s32.totalorder %s14, 1
    %p69 = scmp.ne.s32.totalorder %s64, %s66
    %p70 = scmp.eq.s32.totalorder %s14, 0
    %p71 = por %p69, %p70
    %p72 = scmp.ne.s32.totalorder %s64, %s66
    %p73 = scmp.eq.s32.totalorder %s19, 1
    %p74 = por %p72, %p73
    %p75 = scmp.ne.s32.totalorder %s66, %s67
    %p76 = scmp.eq.s32.totalorder %s19, 0
    %p77 = por %p75, %p76
    %p78 = scmp.ne.s32.totalorder %s66, %s67
    %p79 = scmp.eq.s32.totalorder %s20, 1
    %p80 = por %p78, %p79
    %p82 = scmp.ne.s32.totalorder %s67, %s81
    %p83 = scmp.eq.s32.totalorder %s20, 0
    %p84 = por %p82, %p83
    %s86 = sadd.s32 %s85, 1
    %p89 = scmp.eq.s32.totalorder %s14, 1
    %p90 = scmp.ne.s32.totalorder %s85, %s87
    %p91 = scmp.eq.s32.totalorder %s14, 0
    %p92 = por %p90, %p91
    %p93 = scmp.ne.s32.totalorder %s85, %s87
    %p94 = scmp.eq.s32.totalorder %s19, 1
    %p95 = por %p93, %p94
    %p96 = scmp.ne.s32.totalorder %s87, %s88
    %p97 = scmp.eq.s32.totalorder %s19, 0
    %p98 = por %p96, %p97
    %p99 = scmp.ne.s32.totalorder %s87, %s88
    %p100 = scmp.eq.s32.totalorder %s20, 1
    %p101 = por %p99, %p100
    %p103 = scmp.ne.s32.totalorder %s88, %s102
    %p104 = scmp.eq.s32.totalorder %s20, 0
    %p105 = por %p103, %p104
    %s107 = sadd.s32 %s106, 1
    %p110 = scmp.eq.s32.totalorder %s14, 1
    %p111 = scmp.ne.s32.totalorder %s106, %s108
    %p112 = scmp.eq.s32.totalorder %s14, 0
    %p113 = por %p111, %p112
    %p114 = scmp.ne.s32.totalorder %s106, %s108
    %p115 = scmp.eq.s32.totalorder %s19, 1
    %p116 = por %p114, %p115
    %p117 = scmp.ne.s32.totalorder %s108, %s109
    %p118 = scmp.eq.s32.totalorder %s19, 0
    %p119 = por %p117, %p118
    %p120 = scmp.ne.s32.totalorder %s108, %s109
    %p121 = scmp.eq.s32.totalorder %s20, 1
    %p122 = por %p120, %p121
    %p124 = scmp.ne.s32.totalorder %s109, %s123
    %p125 = scmp.eq.s32.totalorder %s20, 0
    %p126 = por %p124, %p125
    %s128 = sadd.s32 %s127, 1
    %p131 = scmp.eq.s32.totalorder %s14, 1
    %p132 = scmp.ne.s32.totalorder %s127, %s129
    %p133 = scmp.eq.s32.totalorder %s14, 0
    %p134 = por %p132, %p133
    %p135 = scmp.ne.s32.totalorder %s127, %s129
    %p136 = scmp.eq.s32.totalorder %s19, 1
    %p137 = por %p135, %p136
    %p138 = scmp.ne.s32.totalorder %s129, %s130
    %p139 = scmp.eq.s32.totalorder %s19, 0
    %p140 = por %p138, %p139
    %p141 = scmp.ne.s32.totalorder %s129, %s130
    %p142 = scmp.eq.s32.totalorder %s20, 1
    %p143 = por %p141, %p142
    %p145 = scmp.ne.s32.totalorder %s130, %s144
    %p146 = scmp.eq.s32.totalorder %s20, 0
    %p147 = por %p145, %p146
    %s149 = sadd.s32 %s148, 1
    %p152 = scmp.eq.s32.totalorder %s14, 1
    %p153 = scmp.ne.s32.totalorder %s148, %s150
    %p154 = scmp.eq.s32.totalorder %s14, 0
    %p155 = por %p153, %p154
    %p156 = scmp.ne.s32.totalorder %s148, %s150
    %p157 = scmp.eq.s32.totalorder %s19, 1
    %p158 = por %p156, %p157
    %p159 = scmp.ne.s32.totalorder %s150, %s151
    %p160 = scmp.eq.s32.totalorder %s19, 0
    %p161 = por %p159, %p160
    %p162 = scmp.ne.s32.totalorder %s150, %s151
    %p163 = scmp.eq.s32.totalorder %s20, 1
    %p164 = por %p162, %p163
    %p166 = scmp.ne.s32.totalorder %s151, %s165
    %p167 = scmp.eq.s32.totalorder %s20, 0
    %p168 = por %p166, %p167
    %s169 = smul.u32 %s21, 2
    %s170 = sadd.s32 %s169, %s22
    %s171 = smul.u32 %s33, 2
    %s172 = sadd.s32 %s171, %s29
    %s173 = ssub.s32 %s170, %s172
    %p174 = scmp.eq.s32.totalorder %s173, 0
    %s176 = sadd.s32 %s175, 1
    %s177 = scalar_select %p174, %s175, %s176
    %p180 = pneg %p174
    %p181 = scmp.eq.s32.totalorder %s14, 1
    %p182 = por %p180, %p181
    %p183 = scmp.ne.s32.totalorder %s175, %s178
    %p184 = scmp.eq.s32.totalorder %s14, 0
    %p185 = por %p183, %p184
    %p186 = scmp.ne.s32.totalorder %s175, %s178
    %p187 = scmp.eq.s32.totalorder %s19, 1
    %p188 = por %p186, %p187
    %p189 = scmp.ne.s32.totalorder %s178, %s179
    %p190 = scmp.eq.s32.totalorder %s19, 0
    %p191 = por %p189, %p190
    %p192 = scmp.ne.s32.totalorder %s178, %s179
    %p193 = scmp.eq.s32.totalorder %s20, 1
    %p194 = por %p192, %p193
    %p196 = scmp.ne.s32.totalorder %s179, %s195
    %p197 = scmp.eq.s32.totalorder %s20, 0
    %p198 = por %p196, %p197
    %s199 = ssub.s32 %s21, %s33
    %p200 = scmp.eq.s32.totalorder %s199, 0
    %s202 = sadd.s32 %s201, 1
    %s203 = scalar_select %p200, %s201, %s202
    %p206 = pneg %p200
    %p207 = scmp.eq.s32.totalorder %s14, 1
    %p208 = por %p206, %p207
    %p209 = scmp.ne.s32.totalorder %s201, %s204
    %p210 = scmp.eq.s32.totalorder %s14, 0
    %p211 = por %p209, %p210
    %p212 = scmp.ne.s32.totalorder %s201, %s204
    %p213 = scmp.eq.s32.totalorder %s19, 1
    %p214 = por %p212, %p213
    %p215 = scmp.ne.s32.totalorder %s204, %s205
    %p216 = scmp.eq.s32.totalorder %s19, 0
    %p217 = por %p215, %p216
    %p218 = scmp.ne.s32.totalorder %s204, %s205
    %p219 = scmp.eq.s32.totalorder %s20, 1
    %p220 = por %p218, %p219
    %p222 = scmp.ne.s32.totalorder %s205, %s221
    %p223 = scmp.eq.s32.totalorder %s20, 0
    %p224 = por %p222, %p223
    %p225 = scmp.le.s32.totalorder 1, %s14
    %p226 = scmp.lt.s32.totalorder %s14, 3
    %p227 = pnand %p225, %p226
    %p228 = pneg %p227
    // Predicated region
    $region9: #{simple_rnn_forward.1} parent=5 // pred_check
      _
    $region10: #{simple_rnn_forward.1} parent=5 // pred_check_branch
      %230 = sbr.rel (%p227) target = $region12
    $region11: #{simple_rnn_forward.1} parent=5 // pred_region
      %s231 = ssub.s32 %s14, 1
      // Predicated region
      $region13: #{simple_rnn_forward.1} parent=11 // pred_check
        %p232 = pneg %p77
      $region14: #{simple_rnn_forward.1} parent=11 // pred_check_branch
        %234 = sbr.rel (%p232) target = $region16
      $region15: #{simple_rnn_forward.1} parent=11 // pred_region
        _
      $region16: #{simple_rnn_forward.1} parent=11 // pred_fallthru
        _
      // Predicated region
      $region17: #{simple_rnn_forward.1} parent=11 // pred_check
        %p235 = pneg %p98
      $region18: #{simple_rnn_forward.1} parent=11 // pred_check_branch
        %237 = sbr.rel (%p235) target = $region20
      $region19: #{simple_rnn_forward.1} parent=11 // pred_region
        _
      $region20: #{simple_rnn_forward.1} parent=11 // pred_fallthru
        _
      // Predicated region
      $region21: #{simple_rnn_forward.1} parent=11 // pred_check
        %p238 = pneg %p119
      $region22: #{simple_rnn_forward.1} parent=11 // pred_check_branch
        %240 = sbr.rel (%p238) target = $region24
      $region23: #{simple_rnn_forward.1} parent=11 // pred_region
        _
      $region24: #{simple_rnn_forward.1} parent=11 // pred_fallthru
        _
      // Predicated region
      $region25: #{simple_rnn_forward.1} parent=11 // pred_check
        %p241 = pneg %p140
      $region26: #{simple_rnn_forward.1} parent=11 // pred_check_branch
        %243 = sbr.rel (%p241) target = $region28
      $region27: #{simple_rnn_forward.1} parent=11 // pred_region
        _
      $region28: #{simple_rnn_forward.1} parent=11 // pred_fallthru
        _
      // Predicated region
      $region29: #{simple_rnn_forward.1} parent=11 // pred_check
        %p244 = pneg %p161
      $region30: #{simple_rnn_forward.1} parent=11 // pred_check_branch
        %246 = sbr.rel (%p244) target = $region32
      $region31: #{simple_rnn_forward.1} parent=11 // pred_region
        _
      $region32: #{simple_rnn_forward.1} parent=11 // pred_fallthru
        _
    $region12: #{simple_rnn_forward.1} parent=5 // pred_fallthru
      _
    %p247 = scmp.lt.s32.totalorder %s14, 2
    // Predicated region
    $region33: #{simple_rnn_forward.1} parent=5 // pred_check
      %p248 = pneg %p247
    $region34: #{simple_rnn_forward.1} parent=5 // pred_check_branch
      %250 = sbr.rel (%p248) target = $region36
    $region35: #{simple_rnn_forward.1} parent=5 // pred_region
      // Predicated region
      $region37: #{simple_rnn_forward.1} parent=35 // pred_check
        %p251 = pneg %p50
      $region38: #{simple_rnn_forward.1} parent=35 // pred_check_branch
        %253 = sbr.rel (%p251) target = $region40
      $region39: #{simple_rnn_forward.1} parent=35 // pred_region
        %s254 = smul.u32 %s21, 2
        %s255 = sadd.s32 %s254, %s22
        %s256 = smul.u32 4, %s255
        %p257 = scmp.lt.s32.totalorder %s256, 7
        %s258 = scalar_select %p257, %s256, 7
        %s259 = smul.addr %s258, 8
        %s260 = scalar_lea.vmem %s0, %s259
        %s261 = smul.u32 %s21, 2
        %s262 = sadd.s32 %s261, %s22
        %s263 = smul.u32 4, %s262
      $region40: #{simple_rnn_forward.1} parent=35 // pred_fallthru
        _
    $region36: #{simple_rnn_forward.1} parent=5 // pred_fallthru
      _
    %p264 = scmp.le.s32.totalorder 1, %s14
    %p265 = scmp.lt.s32.totalorder %s14, 3
    %p266 = pnand %p264, %p265
    %p267 = pneg %p266
    // Predicated region
    $region41: #{simple_rnn_forward.1} parent=5 // pred_check
      _
    $region42: #{simple_rnn_forward.1} parent=5 // pred_check_branch
      %269 = sbr.rel (%p266) target = $region44
    $region43: #{simple_rnn_forward.1} parent=5 // pred_region
      %s270 = ssub.s32 %s14, 1
      %s271 = smul.u32 %s23, 2
      %s272 = sadd.s32 %s271, %s24
      %s273 = smul.u32 4, %s272
      %p274 = scmp.lt.s32.totalorder %s273, 7
      %s275 = scalar_select %p274, %s273, 7
      %s276 = smul.addr %s275, 8
      %s277 = scalar_lea.vmem %s0, %s276
      %p278 = pneg %p56
      %p279 = pneg %p53
      %p280 = pneg %p77
      %p281 = pneg %p74
      %p282 = pneg %p98
      %p283 = pneg %p95
      %p284 = pneg %p119
      %p285 = pneg %p116
      %p286 = pneg %p140
      %p287 = pneg %p137
      %p288 = pneg %p161
      %p289 = pneg %p158
      %p290 = pneg %p191
      %p291 = pneg %p188
      %s292 = smul.u32 %s23, 2
      %s293 = sadd.s32 %s292, %s24
      %s294 = smul.u32 4, %s293
      %p295 = scmp.lt.s32.totalorder %s294, 7
      %s296 = scalar_select %p295, %s294, 7
      %s297 = smul.addr %s296, 8
      %s298 = scalar_lea.vmem %s6, %s297
      %p299 = pneg %p217
      %p300 = pneg %p214
      %p301 = scmp.lt.s32.totalorder %s23, 0
      %s302 = scalar_select %p301, %s23, 0
      %s303 = smul.addr %s302, 8
      %s304 = scalar_lea.vmem %s7, %s303
      %s305 = smul.u32 %s23, 2
      %s306 = sadd.s32 %s305, %s24
      %s307 = smul.u32 4, %s306
      %p308 = scmp.lt.s32.totalorder %s307, 7
      %s309 = scalar_select %p308, %s307, 7
      %s310 = smul.addr %s309, 8
      %s311 = scalar_lea.vmem %s0, %s310
      %s312 = smul.u32 %s23, 2
      %s313 = sadd.s32 %s312, %s24
      %s314 = smul.u32 4, %s313
      %s315 = smul.u32 %s23, 2
      %s316 = sadd.s32 %s315, %s24
      %s317 = smul.u32 4, %s316
      %p318 = scmp.lt.s32.totalorder %s317, 7
      %s319 = scalar_select %p318, %s317, 7
      %s320 = smul.addr %s319, 8
      %s321 = scalar_lea.vmem %s6, %s320
      %s322 = smul.u32 %s23, 2
      %s323 = sadd.s32 %s322, %s24
      %s324 = smul.u32 4, %s323
      %p325 = scmp.lt.s32.totalorder %s23, 0
      %s326 = scalar_select %p325, %s23, 0
      %s327 = smul.addr %s326, 8
      %s328 = scalar_lea.vmem %s7, %s327
      %p329 = scmp.eq.s32.totalorder %s24, 0
      // Predicated region
      $region45: #{simple_rnn_forward.1} parent=43 // pred_check
        %p330 = pneg %p329
      $region46: #{simple_rnn_forward.1} parent=43 // pred_check_branch
        %332 = sbr.rel (%p330) target = $region48
      $region47: #{simple_rnn_forward.1} parent=43 // pred_region
        %333 = vst [vmem:[#allocation3] sm:$0xff] 0.0
      $region48: #{simple_rnn_forward.1} parent=43 // pred_fallthru
        _
      %v334 = vld [vmem:[%s311] sm:$0xff]
      %v335 = vld [vmem:[%s311 + $0x8] sm:$0xff]
      %v336 = vld [vmem:[%s311 + $0x10] sm:$0xff]
      %v337 = vld [vmem:[%s311 + $0x18] sm:$0xff]
      %v338 = vld [vmem:[%s1] sm:$0xf]
      %v339 = vld [vmem:[%s3] sm:$0x1]
      %v341 = vperm.slane %v339, 0
      %vm343 = vcmask 31744
      %v345 = vsel %vm343, %v334, 0
      %v348 = vsel %vm343, %v335, 0
      %v351 = vsel %vm343, %v336, 0
      %v354 = vsel %vm343, %v337, 0
      %vm356 = vcmask 1043456
      %v358 = vsel %vm356, %v338, 0
      %360 = vmatpush.msra.mxu0 0.0
      %361 = vmatpush.msra.mxu0 0.0
      %362 = vmatpush.msra.mxu0 0.0
      %363 = vmatpush.msra.mxu0 0.0
      %364 = vmatpush.msra.mxu0 0.0
      %365 = vmatpush.msra.mxu0 0.0
      %366 = vmatpush.msra.mxu0 0.0
      %367 = vmatpush.msra.mxu0 0.0
      %368 = vmatpush.msra.mxu0 0.0
      %369 = vmatpush.msra.mxu0 0.0
      %370 = vmatpush.msra.mxu0 0.0
      %371 = vmatpush.msra.mxu0 0.0
      %372 = vmatpush.msra.mxu0 0.0
      %373 = vmatpush.msra.mxu0 0.0
      %374 = vmatpush.msra.mxu0 0.0
      %375 = vmatpush.msra.mxu0 %v358
      %376 = vmatmul.f32.gmra.mxu0 %v345
      %v377 = vpop.f32.mrf.mxu0
      %v378 = vadd.f32 %v341, %v377
      %379 = vmatmul.f32.gmra.mxu0 %v348
      %v380 = vpop.f32.mrf.mxu0
      %v381 = vadd.f32 %v341, %v380
      %382 = vmatmul.f32.gmra.mxu0 %v351
      %v383 = vpop.f32.mrf.mxu0
      %v384 = vadd.f32 %v341, %v383
      %385 = vmatmul.f32.gmra.mxu0 %v354
      %v386 = vpop.f32.mrf.mxu0
      %v387 = vadd.f32 %v341, %v386
      %388 = vdwg.mxu0
      %389 = vst [vmem:[#allocation2] sm:$0xff] %v378
      %390 = vst [vmem:[#allocation2 + $0x8] sm:$0xff] %v381
      %391 = vst [vmem:[#allocation2 + $0x10] sm:$0xff] %v384
      %392 = vst [vmem:[#allocation2 + $0x18] sm:$0xff] %v387
      %v393 = vld [vmem:[#allocation3] sm:$0xff]
      %v394 = vld [vmem:[#allocation2] sm:$0xff]
      %v395 = vld [vmem:[%s2] sm:$0xff]
      %v396 = vld [vmem:[%s2 + $0x8] sm:$0xff]
      %v397 = vld [vmem:[%s2 + $0x10] sm:$0xff]
      %v398 = vld [vmem:[%s2 + $0x18] sm:$0xff]
      %v399 = vld [vmem:[%s2 + $0x20] sm:$0xff]
      %v400 = vld [vmem:[%s2 + $0x28] sm:$0xff]
      %v401 = vld [vmem:[%s2 + $0x30] sm:$0xff]
      %v402 = vld [vmem:[%s2 + $0x38] sm:$0xff]
      %v403 = vld [vmem:[%s2 + $0x40] sm:$0xff]
      %v404 = vld [vmem:[%s2 + $0x48] sm:$0xff]
      %v405 = vld [vmem:[%s2 + $0x50] sm:$0xff]
      %v406 = vld [vmem:[%s2 + $0x58] sm:$0xff]
      %v407 = vld [vmem:[%s2 + $0x60] sm:$0xff]
      %v408 = vld [vmem:[%s2 + $0x68] sm:$0xff]
      %v409 = vld [vmem:[%s2 + $0x70] sm:$0xff]
      %v410 = vld [vmem:[%s2 + $0x78] sm:$0xff]
      %411 = vmatpush.msra.mxu0 %v410
      %412 = vmatpush.msra.mxu0 %v409
      %413 = vmatpush.msra.mxu0 %v408
      %414 = vmatpush.msra.mxu0 %v407
      %415 = vmatpush.msra.mxu0 %v406
      %416 = vmatpush.msra.mxu0 %v405
      %417 = vmatpush.msra.mxu0 %v404
      %418 = vmatpush.msra.mxu0 %v403
      %419 = vmatpush.msra.mxu0 %v402
      %420 = vmatpush.msra.mxu0 %v401
      %421 = vmatpush.msra.mxu0 %v400
      %422 = vmatpush.msra.mxu0 %v399
      %423 = vmatpush.msra.mxu0 %v398
      %424 = vmatpush.msra.mxu0 %v397
      %425 = vmatpush.msra.mxu0 %v396
      %426 = vmatpush.msra.mxu0 %v395
      %427 = vmatmul.f32.gmra.mxu0 %v393
      %v428 = vpop.f32.mrf.mxu0
      %v429 = vadd.f32 0.0, %v428
      %430 = vdwg.mxu0
      %v431 = vadd.f32 %v394, %v429
      %v432 = vtanh.pop %v431
      %433 = vst [vmem:[#allocation2] sm:$0xff] %v432
      %s434 = scalar_lea.vmem [#allocation2], 8
      %v435 = vld [vmem:[%s434] sm:$0xff]
      %v436 = vld [vmem:[%s2] sm:$0xff]
      %v437 = vld [vmem:[%s2 + $0x8] sm:$0xff]
      %v438 = vld [vmem:[%s2 + $0x10] sm:$0xff]
      %v439 = vld [vmem:[%s2 + $0x18] sm:$0xff]
      %v440 = vld [vmem:[%s2 + $0x20] sm:$0xff]
      %v441 = vld [vmem:[%s2 + $0x28] sm:$0xff]
      %v442 = vld [vmem:[%s2 + $0x30] sm:$0xff]
      %v443 = vld [vmem:[%s2 + $0x38] sm:$0xff]
      %v444 = vld [vmem:[%s2 + $0x40] sm:$0xff]
      %v445 = vld [vmem:[%s2 + $0x48] sm:$0xff]
      %v446 = vld [vmem:[%s2 + $0x50] sm:$0xff]
      %v447 = vld [vmem:[%s2 + $0x58] sm:$0xff]
      %v448 = vld [vmem:[%s2 + $0x60] sm:$0xff]
      %v449 = vld [vmem:[%s2 + $0x68] sm:$0xff]
      %v450 = vld [vmem:[%s2 + $0x70] sm:$0xff]
      %v451 = vld [vmem:[%s2 + $0x78] sm:$0xff]
      %452 = vmatpush.msra.mxu0 %v451
      %453 = vmatpush.msra.mxu0 %v450
      %454 = vmatpush.msra.mxu0 %v449
      %455 = vmatpush.msra.mxu0 %v448
      %456 = vmatpush.msra.mxu0 %v447
      %457 = vmatpush.msra.mxu0 %v446
      %458 = vmatpush.msra.mxu0 %v445
      %459 = vmatpush.msra.mxu0 %v444
      %460 = vmatpush.msra.mxu0 %v443
      %461 = vmatpush.msra.mxu0 %v442
      %462 = vmatpush.msra.mxu0 %v441
      %463 = vmatpush.msra.mxu0 %v440
      %464 = vmatpush.msra.mxu0 %v439
      %465 = vmatpush.msra.mxu0 %v438
      %466 = vmatpush.msra.mxu0 %v437
      %467 = vmatpush.msra.mxu0 %v436
      %468 = vmatmul.f32.gmra.mxu0 %v432
      %v469 = vpop.f32.mrf.mxu0
      %v470 = vadd.f32 0.0, %v469
      %471 = vdwg.mxu0
      %v472 = vadd.f32 %v435, %v470
      %v473 = vtanh.pop %v472
      %474 = vst [vmem:[%s434] sm:$0xff] %v473
      %s475 = scalar_lea.vmem [#allocation2], 16
      %v476 = vld [vmem:[%s475] sm:$0xff]
      %v477 = vld [vmem:[%s2] sm:$0xff]
      %v478 = vld [vmem:[%s2 + $0x8] sm:$0xff]
      %v479 = vld [vmem:[%s2 + $0x10] sm:$0xff]
      %v480 = vld [vmem:[%s2 + $0x18] sm:$0xff]
      %v481 = vld [vmem:[%s2 + $0x20] sm:$0xff]
      %v482 = vld [vmem:[%s2 + $0x28] sm:$0xff]
      %v483 = vld [vmem:[%s2 + $0x30] sm:$0xff]
      %v484 = vld [vmem:[%s2 + $0x38] sm:$0xff]
      %v485 = vld [vmem:[%s2 + $0x40] sm:$0xff]
      %v486 = vld [vmem:[%s2 + $0x48] sm:$0xff]
      %v487 = vld [vmem:[%s2 + $0x50] sm:$0xff]
      %v488 = vld [vmem:[%s2 + $0x58] sm:$0xff]
      %v489 = vld [vmem:[%s2 + $0x60] sm:$0xff]
      %v490 = vld [vmem:[%s2 + $0x68] sm:$0xff]
      %v491 = vld [vmem:[%s2 + $0x70] sm:$0xff]
      %v492 = vld [vmem:[%s2 + $0x78] sm:$0xff]
      %493 = vmatpush.msra.mxu0 %v492
      %494 = vmatpush.msra.mxu0 %v491
      %495 = vmatpush.msra.mxu0 %v490
      %496 = vmatpush.msra.mxu0 %v489
      %497 = vmatpush.msra.mxu0 %v488
      %498 = vmatpush.msra.mxu0 %v487
      %499 = vmatpush.msra.mxu0 %v486
      %500 = vmatpush.msra.mxu0 %v485
      %501 = vmatpush.msra.mxu0 %v484
      %502 = vmatpush.msra.mxu0 %v483
      %503 = vmatpush.msra.mxu0 %v482
      %504 = vmatpush.msra.mxu0 %v481
      %505 = vmatpush.msra.mxu0 %v480
      %506 = vmatpush.msra.mxu0 %v479
      %507 = vmatpush.msra.mxu0 %v478
      %508 = vmatpush.msra.mxu0 %v477
      %509 = vmatmul.f32.gmra.mxu0 %v473
      %v510 = vpop.f32.mrf.mxu0
      %v511 = vadd.f32 0.0, %v510
      %512 = vdwg.mxu0
      %v513 = vadd.f32 %v476, %v511
      %v514 = vtanh.pop %v513
      %515 = vst [vmem:[%s475] sm:$0xff] %v514
      %s516 = scalar_lea.vmem [#allocation2], 24
      %v517 = vld [vmem:[%s516] sm:$0xff]
      %v518 = vld [vmem:[%s2] sm:$0xff]
      %v519 = vld [vmem:[%s2 + $0x8] sm:$0xff]
      %v520 = vld [vmem:[%s2 + $0x10] sm:$0xff]
      %v521 = vld [vmem:[%s2 + $0x18] sm:$0xff]
      %v522 = vld [vmem:[%s2 + $0x20] sm:$0xff]
      %v523 = vld [vmem:[%s2 + $0x28] sm:$0xff]
      %v524 = vld [vmem:[%s2 + $0x30] sm:$0xff]
      %v525 = vld [vmem:[%s2 + $0x38] sm:$0xff]
      %v526 = vld [vmem:[%s2 + $0x40] sm:$0xff]
      %v527 = vld [vmem:[%s2 + $0x48] sm:$0xff]
      %v528 = vld [vmem:[%s2 + $0x50] sm:$0xff]
      %v529 = vld [vmem:[%s2 + $0x58] sm:$0xff]
      %v530 = vld [vmem:[%s2 + $0x60] sm:$0xff]
      %v531 = vld [vmem:[%s2 + $0x68] sm:$0xff]
      %v532 = vld [vmem:[%s2 + $0x70] sm:$0xff]
      %v533 = vld [vmem:[%s2 + $0x78] sm:$0xff]
      %534 = vmatpush.msra.mxu0 %v533
      %535 = vmatpush.msra.mxu0 %v532
      %536 = vmatpush.msra.mxu0 %v531
      %537 = vmatpush.msra.mxu0 %v530
      %538 = vmatpush.msra.mxu0 %v529
      %539 = vmatpush.msra.mxu0 %v528
      %540 = vmatpush.msra.mxu0 %v527
      %541 = vmatpush.msra.mxu0 %v526
      %542 = vmatpush.msra.mxu0 %v525
      %543 = vmatpush.msra.mxu0 %v524
      %544 = vmatpush.msra.mxu0 %v523
      %545 = vmatpush.msra.mxu0 %v522
      %546 = vmatpush.msra.mxu0 %v521
      %547 = vmatpush.msra.mxu0 %v520
      %548 = vmatpush.msra.mxu0 %v519
      %549 = vmatpush.msra.mxu0 %v518
      %550 = vmatmul.f32.gmra.mxu0 %v514
      %v551 = vpop.f32.mrf.mxu0
      %v552 = vadd.f32 0.0, %v551
      %553 = vdwg.mxu0
      %v554 = vadd.f32 %v517, %v552
      %v555 = vtanh.pop %v554
      %556 = vst [vmem:[%s516] sm:$0xff] %v555
      %557 = vst [vmem:[#allocation3] sm:$0xff] %v555
      %v558 = vld [vmem:[#allocation2] sm:$0xff]
      %v559 = vld [vmem:[#allocation2 + $0x8] sm:$0xff]
      %v560 = vld [vmem:[#allocation2 + $0x10] sm:$0xff]
      %v561 = vld [vmem:[#allocation2 + $0x18] sm:$0xff]
      %v562 = vld [vmem:[%s4] sm:$0xff]
      %v563 = vld [vmem:[%s4 + $0x8] sm:$0xff]
      %v564 = vld [vmem:[%s4 + $0x10] sm:$0xff]
      %v565 = vld [vmem:[%s4 + $0x18] sm:$0xff]
      %v566 = vld [vmem:[%s4 + $0x20] sm:$0xff]
      %v567 = vld [vmem:[%s4 + $0x28] sm:$0xff]
      %v568 = vld [vmem:[%s4 + $0x30] sm:$0xff]
      %v569 = vld [vmem:[%s4 + $0x38] sm:$0xff]
      %v570 = vld [vmem:[%s4 + $0x40] sm:$0xff]
      %v571 = vld [vmem:[%s4 + $0x48] sm:$0xff]
      %v572 = vld [vmem:[%s4 + $0x50] sm:$0xff]
      %v573 = vld [vmem:[%s4 + $0x58] sm:$0xff]
      %v574 = vld [vmem:[%s4 + $0x60] sm:$0xff]
      %v575 = vld [vmem:[%s4 + $0x68] sm:$0xff]
      %v576 = vld [vmem:[%s4 + $0x70] sm:$0xff]
      %v577 = vld [vmem:[%s4 + $0x78] sm:$0xff]
      %v578 = vld [vmem:[%s5] sm:$0x1]
      %v580 = vperm.slane %v578, 0
      %582 = vmatpush.msra.mxu0 %v577
      %583 = vmatpush.msra.mxu0 %v576
      %584 = vmatpush.msra.mxu0 %v575
      %585 = vmatpush.msra.mxu0 %v574
      %586 = vmatpush.msra.mxu0 %v573
      %587 = vmatpush.msra.mxu0 %v572
      %588 = vmatpush.msra.mxu0 %v571
      %589 = vmatpush.msra.mxu0 %v570
      %590 = vmatpush.msra.mxu0 %v569
      %591 = vmatpush.msra.mxu0 %v568
      %592 = vmatpush.msra.mxu0 %v567
      %593 = vmatpush.msra.mxu0 %v566
      %594 = vmatpush.msra.mxu0 %v565
      %595 = vmatpush.msra.mxu0 %v564
      %596 = vmatpush.msra.mxu0 %v563
      %597 = vmatpush.msra.mxu0 %v562
      %598 = vmatmul.f32.gmra.mxu0 %v558
      %v599 = vpop.f32.mrf.mxu0
      %v600 = vadd.f32 %v580, %v599
      %601 = vmatmul.f32.gmra.mxu0 %v559
      %v602 = vpop.f32.mrf.mxu0
      %v603 = vadd.f32 %v580, %v602
      %604 = vmatmul.f32.gmra.mxu0 %v560
      %v605 = vpop.f32.mrf.mxu0
      %v606 = vadd.f32 %v580, %v605
      %607 = vmatmul.f32.gmra.mxu0 %v561
      %v608 = vpop.f32.mrf.mxu0
      %v609 = vadd.f32 %v580, %v608
      %610 = vdwg.mxu0
      %611 = vst [vmem:[%s321] sm:$0xff] %v600
      %612 = vst [vmem:[%s321 + $0x8] sm:$0xff] %v603
      %613 = vst [vmem:[%s321 + $0x10] sm:$0xff] %v606
      %614 = vst [vmem:[%s321 + $0x18] sm:$0xff] %v609
      %p615 = scmp.eq.s32.totalorder %s24, 1
      // Predicated region
      $region49: #{simple_rnn_forward.1} parent=43 // pred_check
        %p616 = pneg %p615
      $region50: #{simple_rnn_forward.1} parent=43 // pred_check_branch
        %618 = sbr.rel (%p616) target = $region52
      $region51: #{simple_rnn_forward.1} parent=43 // pred_region
        %619 = vst [vmem:[%s328] sm:$0xff] %v555
      $region52: #{simple_rnn_forward.1} parent=43 // pred_fallthru
        _
      %s620 = smul.u32 %s23, 2
      %s621 = sadd.s32 %s620, %s24
      %s622 = smul.u32 4, %s621
      %p623 = scmp.lt.s32.totalorder %s622, 7
      %s624 = scalar_select %p623, %s622, 7
      %s625 = smul.addr %s624, 8
      %s626 = scalar_lea.vmem %s6, %s625
      %p627 = scmp.lt.s32.totalorder %s23, 0
      %s628 = scalar_select %p627, %s23, 0
      %s629 = smul.addr %s628, 8
      %s630 = scalar_lea.vmem %s7, %s629
      // Predicated region
      $region53: #{simple_rnn_forward.1} parent=43 // pred_check
        %p631 = pneg %p188
      $region54: #{simple_rnn_forward.1} parent=43 // pred_check_branch
        %633 = sbr.rel (%p631) target = $region56
      $region55: #{simple_rnn_forward.1} parent=43 // pred_region
        %s634 = smul.u32 %s23, 2
        %s635 = sadd.s32 %s634, %s24
        %s636 = smul.u32 4, %s635
      $region56: #{simple_rnn_forward.1} parent=43 // pred_fallthru
        _
      // Predicated region
      $region57: #{simple_rnn_forward.1} parent=43 // pred_check
        %p637 = pneg %p214
      $region58: #{simple_rnn_forward.1} parent=43 // pred_check_branch
        %639 = sbr.rel (%p637) target = $region60
      $region59: #{simple_rnn_forward.1} parent=43 // pred_region
        _
      $region60: #{simple_rnn_forward.1} parent=43 // pred_fallthru
        _
      // Predicated region
      $region61: #{simple_rnn_forward.1} parent=43 // pred_check
        %p640 = pneg %p214
      $region62: #{simple_rnn_forward.1} parent=43 // pred_check_branch
        %642 = sbr.rel (%p640) target = $region64
      $region63: #{simple_rnn_forward.1} parent=43 // pred_region
        %p643 = scmp.lt.s32.totalorder %s23, 0
        %s644 = scalar_select %p643, %s23, 0
        %s645 = smul.addr %s644, 8
        %s646 = scalar_lea.vmem %s7, %s645
      $region64: #{simple_rnn_forward.1} parent=43 // pred_fallthru
        _
    $region44: #{simple_rnn_forward.1} parent=5 // pred_fallthru
      _
    %p647 = scmp.le.s32.totalorder 2, %s14
    // Predicated region
    $region65: #{simple_rnn_forward.1} parent=5 // pred_check
      %p648 = pneg %p647
    $region66: #{simple_rnn_forward.1} parent=5 // pred_check_branch
      %650 = sbr.rel (%p648) target = $region68
    $region67: #{simple_rnn_forward.1} parent=5 // pred_region
      %s651 = ssub.s32 %s14, 2
      // Predicated region
      $region69: #{simple_rnn_forward.1} parent=67 // pred_check
        %p652 = pneg %p194
      $region70: #{simple_rnn_forward.1} parent=67 // pred_check_branch
        %654 = sbr.rel (%p652) target = $region72
      $region71: #{simple_rnn_forward.1} parent=67 // pred_region
        %s655 = smul.u32 %s25, 2
        %s656 = sadd.s32 %s655, %s26
        %s657 = smul.u32 4, %s656
        %p658 = scmp.lt.s32.totalorder %s657, 7
        %s659 = scalar_select %p658, %s657, 7
        %s660 = smul.addr %s659, 8
        %s661 = scalar_lea.vmem %s6, %s660
      $region72: #{simple_rnn_forward.1} parent=67 // pred_fallthru
        _
    $region68: #{simple_rnn_forward.1} parent=5 // pred_fallthru
      _
  $region6: #{simple_rnn_forward.1} parent=0 // loop_footer
    %s18 = sadd.s32 1, %s14
  $region7: #{simple_rnn_forward.1} parent=0 // loop_footer_branch
    %13 = sbr.rel target = $region3
  $region8: #{simple_rnn_forward.1} parent=0 // loop_exit
    _

</llo_original>
